<compile_context>
chip_gen: v7x
topology: tpu7x:2x2x1
jax: 0.10.0
libtpu: 0.0.40
codegen_flags: <defaults>
</compile_context>

<pallas_src>
import functools

import jax
import jax.numpy as jnp
from jax import lax
from jax.experimental import pallas as pl
from jax.experimental.pallas import tpu as pltpu

EPSILON = 1e-08


def _vmem_budget_bytes():
    """Usable scoped-VMEM budget: ~3/4 of physical per-TC VMEM, leaving headroom for
    Mosaic internal scratch. Falls back to v7x's 64 MiB (the smallest generation)."""
    cap = 64 << 20
    try:
        info = pltpu.get_tpu_info()
        cap = int(getattr(info, "vmem_capacity_bytes", cap) or cap)
    except Exception:
        pass
    return (cap * 3) // 4


def _row_multiple(itemsize):
    # dtype-aware sublane-full row count: 8 for f32, 16 for bf16, 32 for int8/fp8
    return 8 * max(1, 4 // max(1, itemsize))


def _choose_tile_rows(nc, hw, itemsize, budget):
    """Rows per grid step for the single-sweep kernel, or None if even the minimum
    (row_mult, H*W) block cannot be double-buffered (2 in + 2 out) within budget."""
    row_mult = _row_multiple(itemsize)
    bytes_per_row = hw * itemsize
    if 4 * row_mult * bytes_per_row > budget:
        return None                                  # -> chunked fallback
    target = 4 << 20                                  # ~4 MiB blocks: per-step overhead small
    max_rows = budget // (4 * bytes_per_row)
    tm = min(target // bytes_per_row, max_rows)
    tm = max(row_mult, (tm // row_mult) * row_mult)
    if tm >= nc:
        # One block would cover all rows. Keep >= 2 grid steps when possible so the
        # single "parallel" axis still feeds both TensorCores on v7x.
        if nc >= 2 * row_mult:
            half = -(-nc // 2)
            tm = -(-half // row_mult) * row_mult      # < nc whenever nc >= 2*row_mult
        else:
            tm = nc                                   # block dim == full dim: always legal
    return min(tm, nc)


def _instance_norm_kernel(x_ref, o_ref, *, inv_hw, eps):
    # Block = (TM, H*W): each row is one (n, c) instance, fully resident in VMEM.
    # x_ref is re-read for each sweep (VMEM reads are ~free at 3 vld/cycle) so large
    # f32 intermediates never need to stay live from the stats sweep through the store.
    xf = x_ref[...].astype(jnp.float32)
    mean = jnp.sum(xf, axis=-1, keepdims=True) * inv_hw
    # Centered two-pass variance: matches the reference numerics and cannot go
    # negative (no E[x^2]-mean^2 cancellation); the extra sweep is free (HBM-bound).
    xc = x_ref[...].astype(jnp.float32) - mean
    var = jnp.sum(xc * xc, axis=-1, keepdims=True) * inv_hw
    inv = lax.rsqrt(var + eps)
    # NOTE: rows in a partial last block are compiler padding; rsqrt may produce
    # inf/NaN there, but those rows are discarded on writeback — do not mask them.
    o_ref[...] = ((x_ref[...].astype(jnp.float32) - mean) * inv).astype(o_ref.dtype)


def _instance_norm_chunked_kernel(x_ref, o_ref, s1_ref, s2_ref, *, inv_hw, eps, hw, chunk):
    p = pl.program_id(1)   # 0: accumulate stats, 1: normalize
    k = pl.program_id(2)   # H*W chunk index

    @pl.when(jnp.logical_and(p == 0, k == 0))
    def _():
        s1_ref[...] = jnp.zeros_like(s1_ref)
        s2_ref[...] = jnp.zeros_like(s2_ref)

    @pl.when(p == 0)
    def _():
        xf = x_ref[...].astype(jnp.float32)
        # Mask lanes beyond the true H*W in a partial last chunk (padding is garbage).
        col = k * chunk + lax.broadcasted_iota(jnp.int32, xf.shape, 1)
        xf = jnp.where(col < hw, xf, 0.0)
        s1_ref[...] += jnp.sum(xf, axis=-1, keepdims=True)
        s2_ref[...] += jnp.sum(xf * xf, axis=-1, keepdims=True)

    @pl.when(p == 1)
    def _():
        mean = s1_ref[...] * inv_hw
        var = jnp.maximum(s2_ref[...] * inv_hw - mean * mean, 0.0)  # cancellation guard
        inv = lax.rsqrt(var + eps)
        xf = x_ref[...].astype(jnp.float32)
        o_ref[...] = ((xf - mean) * inv).astype(o_ref.dtype)


def _instance_norm_chunked(x2, epsilon, budget, chunk=None):
    """Fallback for huge H*W: two-phase sweep over H*W chunks with VMEM accumulators."""
    nc, hw = x2.shape
    itemsize = jnp.dtype(x2.dtype).itemsize
    row_mult = _row_multiple(itemsize)
    tm = min(nc, row_mult)
    if chunk is None:
        target = 4 << 20
        chunk = min(hw, max(128, target // (tm * itemsize)))
        chunk = max(128, (chunk // 128) * 128)
        max_chunk = budget // (4 * tm * itemsize)
        if chunk > max_chunk:
            chunk = max(128, (max_chunk // 128) * 128)
    n_chunks = pl.cdiv(hw, chunk)
    grid = (pl.cdiv(nc, tm), 2, n_chunks)

    kernel = functools.partial(
        _instance_norm_chunked_kernel,
        inv_hw=1.0 / float(hw), eps=float(epsilon), hw=hw, chunk=chunk)

    return pl.pallas_call(
        kernel,
        out_shape=jax.ShapeDtypeStruct((nc, hw), x2.dtype),
        grid_spec=pltpu.PrefetchScalarGridSpec(
            num_scalar_prefetch=0,
            grid=grid,
            in_specs=[pl.BlockSpec((tm, chunk), lambda i, p, k: (i, k))],
            # Phase 0 parks the output window on chunk 0 (never written); phase 1
            # writes chunk k. Each output block index occurs in exactly one
            # consecutive run and is fully written once (accumulator-style output).
            out_specs=pl.BlockSpec((tm, chunk), lambda i, p, k: (i, k * p)),
            scratch_shapes=[pltpu.VMEM((tm, 1), jnp.float32),
                            pltpu.VMEM((tm, 1), jnp.float32)],
        ),
        compiler_params=pltpu.CompilerParams(
            dimension_semantics=("parallel", "arbitrary", "arbitrary"),
            vmem_limit_bytes=budget,
        ),
        cost_estimate=pl.CostEstimate(
            flops=9 * nc * hw, transcendentals=nc,
            bytes_accessed=3 * nc * hw * itemsize),
    )(x2)


def instance_norm(x, epsilon=EPSILON):
    """x: (N, C, H, W) -> (N, C, H, W), normalized per (n, c) over the spatial dims."""
    N, C, H, W = x.shape
    nc, hw = N * C, H * W
    # Free for contiguous NCHW; H*W becomes the lane axis (unmasked vst when H*W % 128 == 0).
    # NOTE: when H*W is not a 128-multiple (e.g. 7x7, 14x14) stores are lane-masked;
    # still correct, just lower lane utilization — padding is usually not worth the copy.
    x2 = x.reshape(nc, hw)
    itemsize = jnp.dtype(x.dtype).itemsize
    budget = _vmem_budget_bytes()

    tm = _choose_tile_rows(nc, hw, itemsize, budget)
    if tm is None:
        # H*W too large for full rows to be double-buffered in VMEM (v7x 64 MiB first).
        out = _instance_norm_chunked(x2, epsilon, budget)
        return out.reshape(N, C, H, W)

    grid = (pl.cdiv(nc, tm),)
    kernel = functools.partial(
        _instance_norm_kernel, inv_hw=1.0 / float(hw), eps=float(epsilon))

    out = pl.pallas_call(
        kernel,
        out_shape=jax.ShapeDtypeStruct((nc, hw), x.dtype),
        grid_spec=pltpu.PrefetchScalarGridSpec(
            num_scalar_prefetch=0,
            grid=grid,
            in_specs=[pl.BlockSpec((tm, hw), lambda i: (i, 0))],
            out_specs=pl.BlockSpec((tm, hw), lambda i: (i, 0)),
        ),
        compiler_params=pltpu.CompilerParams(
            # single independent row axis -> shards across v7x's 2 TensorCores
            dimension_semantics=("parallel",),
            vmem_limit_bytes=budget,
        ),
        cost_estimate=pl.CostEstimate(
            flops=7 * nc * hw, transcendentals=nc,
            bytes_accessed=2 * nc * hw * itemsize),
    )(x2)
    return out.reshape(N, C, H, W)


def _reference_instance_norm(x, epsilon=EPSILON):
    xf = x.astype(jnp.float32)
    mean = jnp.mean(xf, axis=(2, 3), keepdims=True)
    xc = xf - mean
    inv = lax.rsqrt(jnp.mean(xc * xc, axis=(2, 3), keepdims=True) + epsilon)
    return (xc * inv).astype(x.dtype)


if __name__ == "__main__":
    key = jax.random.PRNGKey(0)
    k1, k2, k3 = jax.random.split(key, 3)

    # 1) Main path, lane-dense spatial (H*W = 256).
    x = jax.random.normal(k1, (2, 4, 16, 16), dtype=jnp.float32)
    out = jax.block_until_ready(instance_norm(x))
    ref = _reference_instance_norm(x)
    assert out.shape == x.shape
    assert jnp.allclose(out, ref, atol=1e-4, rtol=1e-4), float(jnp.max(jnp.abs(out - ref)))

    # 2) Main path, non-128-multiple spatial, nonzero mean, partial last row block (nc=15).
    x_odd = jax.random.normal(k2, (3, 5, 12, 12), dtype=jnp.float32) * 2.0 + 3.0
    out_odd = jax.block_until_ready(instance_norm(x_odd))
    ref_odd = _reference_instance_norm(x_odd)
    assert jnp.allclose(out_odd, ref_odd, atol=1e-4, rtol=1e-4), float(
        jnp.max(jnp.abs(out_odd - ref_odd)))

    # 3) Main path, bf16 I/O (stats in f32 inside the kernel).
    x_bf = jax.random.normal(k3, (2, 4, 16, 16), dtype=jnp.bfloat16)
    out_bf = jax.block_until_ready(instance_norm(x_bf))
    ref_bf = _reference_instance_norm(x_bf)
    assert jnp.allclose(out_bf.astype(jnp.float32), ref_bf.astype(jnp.float32),
                        atol=3e-2, rtol=3e-2)

    # 4) Chunked fallback, forced small chunk (exercises the huge-H*W path,
    #    including the masked partial last chunk).
    budget = _vmem_budget_bytes()
    for xx in (x, x_odd):
        Nn, Cc, Hh, Ww = xx.shape
        out_c = _instance_norm_chunked(xx.reshape(Nn * Cc, Hh * Ww), EPSILON, budget, chunk=128)
        out_c = jax.block_until_ready(out_c).reshape(xx.shape)
        ref_c = _reference_instance_norm(xx)
        assert jnp.allclose(out_c, ref_c, atol=1e-3, rtol=1e-3), float(
            jnp.max(jnp.abs(out_c - ref_c)))

    print("KERNEL_OK")
</pallas_src>

<mosaic_0001>
module attributes {stable_mosaic.version = 11 : i64} {
  func.func @_instance_norm_kernel(%arg0: i32, %arg1: memref<8x256xf32, #tpu.memory_space<vmem>>, %arg2: memref<8x256xf32, #tpu.memory_space<vmem>>) attributes {dimension_semantics = [#tpu.dimension_semantics<parallel>], iteration_bounds = array<i64: 1>, scalar_prefetch = 0 : i64, scratch_operands = 0 : i64, tpu.core_type = #tpu.core_type<tc>, window_params = [{transform_indices = @transform_0, window_bounds = array<i64: 8, 256>}, {transform_indices = @transform_1, window_bounds = array<i64: 8, 256>}]} {
    %c0 = arith.constant 0 : index
    %c0_0 = arith.constant 0 : index
    %0 = vector.load %arg1[%c0, %c0_0] : memref<8x256xf32, #tpu.memory_space<vmem>>, vector<8x256xf32>
    %cst = arith.constant dense<0.000000e+00> : vector<8xf32>
    %1 = vector.multi_reduction <add>, %0, %cst [1] : vector<8x256xf32> to vector<8xf32>
    %2 = vector.shape_cast %1 : vector<8xf32> to vector<8x1xf32>
    %cst_1 = arith.constant 3.906250e-03 : f32
    %3 = vector.broadcast %cst_1 : f32 to vector<8x1xf32>
    %4 = arith.mulf %2, %3 : vector<8x1xf32>
    %c0_2 = arith.constant 0 : index
    %c0_3 = arith.constant 0 : index
    %5 = vector.load %arg1[%c0_2, %c0_3] : memref<8x256xf32, #tpu.memory_space<vmem>>, vector<8x256xf32>
    %6 = vector.broadcast %4 : vector<8x1xf32> to vector<8x256xf32>
    %7 = arith.subf %5, %6 : vector<8x256xf32>
    %8 = arith.mulf %7, %7 : vector<8x256xf32>
    %cst_4 = arith.constant dense<0.000000e+00> : vector<8xf32>
    %9 = vector.multi_reduction <add>, %8, %cst_4 [1] : vector<8x256xf32> to vector<8xf32>
    %10 = vector.shape_cast %9 : vector<8xf32> to vector<8x1xf32>
    %cst_5 = arith.constant 3.906250e-03 : f32
    %11 = vector.broadcast %cst_5 : f32 to vector<8x1xf32>
    %12 = arith.mulf %10, %11 : vector<8x1xf32>
    %cst_6 = arith.constant 9.99999993E-9 : f32
    %13 = vector.broadcast %cst_6 : f32 to vector<8x1xf32>
    %14 = arith.addf %12, %13 : vector<8x1xf32>
    %15 = math.rsqrt %14 : vector<8x1xf32>
    %c0_7 = arith.constant 0 : index
    %c0_8 = arith.constant 0 : index
    %16 = vector.load %arg1[%c0_7, %c0_8] : memref<8x256xf32, #tpu.memory_space<vmem>>, vector<8x256xf32>
    %17 = vector.broadcast %4 : vector<8x1xf32> to vector<8x256xf32>
    %18 = arith.subf %16, %17 : vector<8x256xf32>
    %19 = vector.broadcast %15 : vector<8x1xf32> to vector<8x256xf32>
    %20 = arith.mulf %18, %19 : vector<8x256xf32>
    %c0_9 = arith.constant 0 : index
    %c0_10 = arith.constant 0 : index
    %21 = vector.load %arg2[%c0_9, %c0_10] : memref<8x256xf32, #tpu.memory_space<vmem>>, vector<8x256xf32>
    tpu.vector_store %arg2[%c0_9, %c0_10], %20 {strides = array<i32>} : memref<8x256xf32, #tpu.memory_space<vmem>>, vector<8x256xf32>,
    return
  }
  func.func @transform_0(%arg0: i32) -> (i32, i32) {
    %c0_i32 = arith.constant 0 : i32
    %c0_i32_0 = arith.constant 0 : i32
    return %arg0, %c0_i32 : i32, i32
  }
  func.func @transform_1(%arg0: i32) -> (i32, i32) {
    %c0_i32 = arith.constant 0 : i32
    %c0_i32_0 = arith.constant 0 : i32
    return %arg0, %c0_i32 : i32, i32
  }
}

</mosaic_0001>

<llo_original>
// kernel: tpu_custom_call.1
$region0: #{tpu_custom_call.1}
  #allocation0 [shape = 'u32[]', space=smem, size = 0x4, offset = 0x4, fixed_abs, tag = 'smem constant byte address 0x4 - core index']
  #allocation1 [shape = 'u32[144,128]{1,0:T(1,128)}', space=vmem, size = 0x12000, scoped, tag = 'internal scratch']
  %s0 = inlined_call_operand.hbm [shape: f32[8,256], index: 0, kind: input, shape index: {}]
  %s1 = inlined_call_operand.hbm [shape: f32[8,256], index: 1, kind: output, shape index: {}]
  %s2 = sld [smem:[#allocation0]]
  $region18: #{tpu_custom_call.1} parent=0
    _
  %s4 = ssub.s32 1, %s2
  %s5 = scalar_select 0, %s4, %s2
  $region1: #{tpu_custom_call.1} parent=0
    #allocation2 [shape = 'u8[8192]{0}', space=vmem, size = 0x2000, scoped, tag = 'input window, operand 0, single buffered']
    #allocation3 [shape = 's32[1]{0}', space=sflag, size = 0x4, scoped, tag = 'scoped memory for tpu_custom_call.1']
    #allocation4 [shape = 's32[1]{0}', space=sflag, size = 0x4, scoped, tag = 'scoped memory for tpu_custom_call.1']
    #allocation5 [shape = 'u8[8192]{0}', space=vmem, size = 0x2000, scoped, tag = 'output window, operand 0, single buffered']
    %6 = vsyncpa [#allocation3], 0
    %7 = vsyncpa [#allocation4], 0
    // Predicated region
    $region2: #{tpu_custom_call.1} parent=1 // pred_check
      _
    $region3: #{tpu_custom_call.1} parent=1 // pred_check_branch
      %9 = sbr.rel (0) target = $region5
    $region4: #{tpu_custom_call.1} parent=1 // pred_region
      %s11 = ssub.s32 256, 256
      %12 = vsyncadd [#allocation3], %s11
      %s14 = sshll.u32 [#allocation2], 4
      %s15 = int_to_ptr.vmem [resolvable:$true] %s14
      %17 = dma.hbm_to_vmem [thread:$0]  %s0, 256, %s15, [#allocation3]
    $region5: #{tpu_custom_call.1} parent=1 // pred_fallthru
      _
    // Predicated region
    $region6: #{tpu_custom_call.1} parent=1 // pred_check
      _
    $region7: #{tpu_custom_call.1} parent=1 // pred_check_branch
      %19 = sbr.rel (0) target = $region9
    $region8: #{tpu_custom_call.1} parent=1 // pred_region
      %20 = dma.done [#allocation3], 256
    $region9: #{tpu_custom_call.1} parent=1 // pred_fallthru
      _
    %v21 = vld [vmem:[#allocation2] sm:$0xff]
    %v22 = vld [vmem:[#allocation2 + $0x8] sm:$0xff]
    %v23 = vadd.f32 %v21, %v22
    %24 = vadd.xlane.f32.xlu0 %v23
    %v25 = vpop.xlane.xlu0 %24
    %v26 = vmul.f32 %v25, 0.00390625
    %v27 = vsub.f32 %v21, %v26
    %v28 = vsub.f32 %v22, %v26
    %v29 = vmul.f32 %v27, %v27
    %v30 = vmul.f32 %v28, %v28
    %v31 = vadd.f32 %v29, %v30
    %32 = vadd.xlane.f32.xlu0 %v31
    %v33 = vpop.xlane.xlu0 %32
    %v34 = vmul.f32 %v33, 0.00390625
    %v35 = vadd.f32 %v34, 1e-08
    %v36 = vrsqrt.pop %v35
    %v37 = vmul.f32 %v27, %v36
    %v38 = vmul.f32 %v28, %v36
    %39 = vst [vmem:[#allocation5] sm:$0xff] %v37
    %40 = vst [vmem:[#allocation5 + $0x8] sm:$0xff] %v38
    // Predicated region
    $region10: #{tpu_custom_call.1} parent=1 // pred_check
      _
    $region11: #{tpu_custom_call.1} parent=1 // pred_check_branch
      %42 = sbr.rel (0) target = $region13
    $region12: #{tpu_custom_call.1} parent=1 // pred_region
      %s44 = ssub.s32 256, 256
      %45 = vsyncadd [#allocation4], %s44
      %s47 = sshll.u32 [#allocation5], 4
      %s48 = int_to_ptr.vmem [resolvable:$true] %s47
      %50 = dma.vmem_to_hbm [thread:$0]  %s48, 256, %s1, [#allocation4]
    $region13: #{tpu_custom_call.1} parent=1 // pred_fallthru
      _
    // Predicated region
    $region14: #{tpu_custom_call.1} parent=1 // pred_check
      _
    $region15: #{tpu_custom_call.1} parent=1 // pred_check_branch
      %52 = sbr.rel (0) target = $region17
    $region16: #{tpu_custom_call.1} parent=1 // pred_region
      %53 = dma.done [#allocation4], 256
    $region17: #{tpu_custom_call.1} parent=1 // pred_fallthru
      _
    %54 = vsyncpa [#allocation3], 1
    %55 = vsyncpa [#allocation4], 1

</llo_original>
